<compile_context>
chip_gen: v6e
topology: v6e:2x2x1
jax: 0.10.0
libtpu: 0.0.40
codegen_flags: <defaults>
</compile_context>

<pallas_src>
import functools

import jax
import jax.numpy as jnp
from jax.experimental import pallas as pl
from jax.experimental.pallas import tpu as pltpu


def _fused_kernel(wb_ref, x_ref, o_ref, *, cin, cmid, cout):
    """One image per grid step.

    wb_ref : SMEM f32[cmid*cin + cmid + cout*cmid + cout]
             flat [w1 | b1 | w3 | b3]; every channel mix is a scalar-broadcast
             VPU FMA (no MXU, no padded weight tiles, bias adds are free).
    x_ref  : VMEM (cin, P)   channels on sublanes, pixels on lanes
    o_ref  : VMEM (cout, P)
    """
    w1_off = 0
    b1_off = cmid * cin
    w3_off = b1_off + cmid
    b3_off = w3_off + cout * cmid

    # 1x1 conv #1 + GELU-like elementwise chain, one mid-channel row at a time.
    v8_rows = []
    for c in range(cmid):
        # v1[c, :] = sum_k w1[c, k] * x[k, :] + b1[c]   (unrolled FMAs)
        v1 = wb_ref[w1_off + c * cin] * x_ref[0:1, :]
        for k in range(1, cin):
            v1 = v1 + wb_ref[w1_off + c * cin + k] * x_ref[k:k + 1, :]
        v1 = v1 + wb_ref[b1_off + c]

        v2 = v1 * 0.5
        v3 = v1 * 0.7071067811865476
        v4 = jax.lax.erf(v3)
        v5 = v4 + 1.0
        v6 = v2 * v5
        # Kept literal (no v1/v2 -> 2.0 simplification) so v1 == 0 reproduces
        # the exact 0/0 = NaN behaviour of the PyTorch forward.
        v7 = v1 / v2 * v3 + jnp.tanh(v4) - v5 + v6
        v8_rows.append(jnp.abs(v7))

    # 1x1 conv #2: v9[co, :] = sum_c w3[co, c] * v8[c, :] + b3[co]
    for co in range(cout):
        acc = v8_rows[0] * wb_ref[w3_off + co * cmid] + wb_ref[b3_off + co]
        for c in range(1, cmid):
            acc = acc + wb_ref[w3_off + co * cmid + c] * v8_rows[c]
        o_ref[co:co + 1, :] = acc


@jax.jit
def model_forward(x_nchw, w1, b1, w3, b3):
    """x_nchw: (N, Cin, H, W) f32; w1: (Cmid, Cin); b1: (Cmid,);
    w3: (Cout, Cmid); b3: (Cout,). Returns (N, Cout, H, W) f32."""
    N, Cin, H, W = x_nchw.shape
    Cmid = w1.shape[0]
    Cout = w3.shape[0]
    HW = H * W

    # NCHW -> (N, Cin, HW): pure reshape, no transpose, no padding. Full-extent
    # block dims (Cin, HW) / (Cout, HW) are exempt from the (8,128) rule; the
    # non-multiple-of-128 tail becomes a single masked store inside the kernel.
    x_flat = x_nchw.reshape(N, Cin, HW)

    # Pack every weight/bias into one tiny flat SMEM array (31 floats).
    # PyTorch Conv2d weight (out, in, 1, 1) maps directly to (out, in) here.
    wb = jnp.concatenate([
        w1.reshape(-1), b1.reshape(-1), w3.reshape(-1), b3.reshape(-1)
    ]).astype(jnp.float32)

    kernel = functools.partial(_fused_kernel, cin=Cin, cmid=Cmid, cout=Cout)

    out = pl.pallas_call(
        kernel,
        out_shape=jax.ShapeDtypeStruct((N, Cout, HW), jnp.float32),
        grid=(N,),
        in_specs=[
            pl.BlockSpec(memory_space=pltpu.MemorySpace.SMEM),   # wb (flat)
            pl.BlockSpec((None, Cin, HW), lambda n: (n, 0, 0)),  # one image
        ],
        out_specs=pl.BlockSpec((None, Cout, HW), lambda n: (n, 0, 0)),
        compiler_params=pltpu.CompilerParams(
            dimension_semantics=("parallel",)),
    )(wb, x_flat)

    # (N, Cout, HW) -> NCHW: pure reshape.
    return out.reshape(N, Cout, H, W)


def reference(x_nchw, w1, b1, w3, b3):
    """Pure-JAX reference of the PyTorch forward (for correctness check)."""
    v1 = jnp.einsum('oc,nchw->nohw', w1, x_nchw) + b1[None, :, None, None]
    v2 = v1 * 0.5
    v3 = v1 * 0.7071067811865476
    v4 = jax.lax.erf(v3)
    v5 = v4 + 1.0
    v6 = v2 * v5
    v7 = v1 / v2 * v3 + jnp.tanh(v4) - v5 + v6
    v8 = jnp.abs(v7)
    return jnp.einsum('oc,nchw->nohw', w3, v8) + b3[None, :, None, None]


if __name__ == "__main__":
    key = jax.random.PRNGKey(0)
    k_x, k_w1, k_b1, k_w3, k_b3 = jax.random.split(key, 5)

    # Shapes implied by the module: Conv2d(4,5,1), Conv2d(5,1,1), input (1,4,16,14)
    N, Cin, H, W = 1, 4, 16, 14
    Cmid, Cout = 5, 1

    x1 = jax.random.normal(k_x, (N, Cin, H, W), dtype=jnp.float32)
    w1 = jax.random.normal(k_w1, (Cmid, Cin), dtype=jnp.float32) * 0.1
    b1 = jax.random.normal(k_b1, (Cmid,), dtype=jnp.float32) * 0.1
    w3 = jax.random.normal(k_w3, (Cout, Cmid), dtype=jnp.float32) * 0.1
    b3 = jax.random.normal(k_b3, (Cout,), dtype=jnp.float32) * 0.1

    out = model_forward(x1, w1, b1, w3, b3)
    jax.block_until_ready(out)
    assert out.shape == (N, Cout, H, W), out.shape

    ref = reference(x1, w1, b1, w3, b3)
    assert jnp.allclose(out, ref, rtol=1e-3, atol=1e-3), \
        float(jnp.max(jnp.abs(out - ref)))

    print("KERNEL_OK")
</pallas_src>

<mosaic_0001>
module attributes {stable_mosaic.version = 11 : i64} {
  func.func @_fused_kernel(%arg0: i32, %arg1: memref<31xf32, #tpu.memory_space<smem>>, %arg2: memref<1x4x224xf32, #tpu.memory_space<vmem>>, %arg3: memref<1x1x224xf32, #tpu.memory_space<vmem>>) attributes {dimension_semantics = [#tpu.dimension_semantics<parallel>], iteration_bounds = array<i64: 1>, scalar_prefetch = 0 : i64, scratch_operands = 0 : i64, tpu.core_type = #tpu.core_type<tc>, window_params = [{transform_indices = @transform_0, window_bounds = array<i64: 31>}, {transform_indices = @transform_1, window_bounds = array<i64: 1, 4, 224>}, {transform_indices = @transform_2, window_bounds = array<i64: 1, 1, 224>}]} {
    %c0 = arith.constant 0 : index
    %0 = memref.load %arg1[%c0] : memref<31xf32, #tpu.memory_space<smem>>
    %c0_0 = arith.constant 0 : index
    %c0_1 = arith.constant 0 : index
    %c0_2 = arith.constant 0 : index
    %1 = vector.load %arg2[%c0_0, %c0_1, %c0_2] : memref<1x4x224xf32, #tpu.memory_space<vmem>>, vector<1x1x224xf32>
    %2 = vector.shape_cast %1 : vector<1x1x224xf32> to vector<1x224xf32>
    %3 = vector.broadcast %0 : f32 to vector<1x224xf32>
    %4 = arith.mulf %3, %2 : vector<1x224xf32>
    %c1 = arith.constant 1 : index
    %5 = memref.load %arg1[%c1] : memref<31xf32, #tpu.memory_space<smem>>
    %c0_3 = arith.constant 0 : index
    %c1_4 = arith.constant 1 : index
    %c0_5 = arith.constant 0 : index
    %6 = vector.load %arg2[%c0_3, %c1_4, %c0_5] : memref<1x4x224xf32, #tpu.memory_space<vmem>>, vector<1x1x224xf32>
    %7 = vector.shape_cast %6 : vector<1x1x224xf32> to vector<1x224xf32>
    %8 = vector.broadcast %5 : f32 to vector<1x224xf32>
    %9 = arith.mulf %8, %7 : vector<1x224xf32>
    %10 = arith.addf %4, %9 : vector<1x224xf32>
    %c2 = arith.constant 2 : index
    %11 = memref.load %arg1[%c2] : memref<31xf32, #tpu.memory_space<smem>>
    %c0_6 = arith.constant 0 : index
    %c2_7 = arith.constant 2 : index
    %c0_8 = arith.constant 0 : index
    %12 = vector.load %arg2[%c0_6, %c2_7, %c0_8] : memref<1x4x224xf32, #tpu.memory_space<vmem>>, vector<1x1x224xf32>
    %13 = vector.shape_cast %12 : vector<1x1x224xf32> to vector<1x224xf32>
    %14 = vector.broadcast %11 : f32 to vector<1x224xf32>
    %15 = arith.mulf %14, %13 : vector<1x224xf32>
    %16 = arith.addf %10, %15 : vector<1x224xf32>
    %c3 = arith.constant 3 : index
    %17 = memref.load %arg1[%c3] : memref<31xf32, #tpu.memory_space<smem>>
    %c0_9 = arith.constant 0 : index
    %c3_10 = arith.constant 3 : index
    %c0_11 = arith.constant 0 : index
    %18 = vector.load %arg2[%c0_9, %c3_10, %c0_11] : memref<1x4x224xf32, #tpu.memory_space<vmem>>, vector<1x1x224xf32>
    %19 = vector.shape_cast %18 : vector<1x1x224xf32> to vector<1x224xf32>
    %20 = vector.broadcast %17 : f32 to vector<1x224xf32>
    %21 = arith.mulf %20, %19 : vector<1x224xf32>
    %22 = arith.addf %16, %21 : vector<1x224xf32>
    %c20 = arith.constant 20 : index
    %23 = memref.load %arg1[%c20] : memref<31xf32, #tpu.memory_space<smem>>
    %24 = vector.broadcast %23 : f32 to vector<1x224xf32>
    %25 = arith.addf %22, %24 : vector<1x224xf32>
    %cst = arith.constant 5.000000e-01 : f32
    %26 = vector.broadcast %cst : f32 to vector<1x224xf32>
    %27 = arith.mulf %25, %26 : vector<1x224xf32>
    %cst_12 = arith.constant 0.707106769 : f32
    %28 = vector.broadcast %cst_12 : f32 to vector<1x224xf32>
    %29 = arith.mulf %25, %28 : vector<1x224xf32>
    %30 = math.erf %29 : vector<1x224xf32>
    %cst_13 = arith.constant 1.000000e+00 : f32
    %31 = vector.broadcast %cst_13 : f32 to vector<1x224xf32>
    %32 = arith.addf %30, %31 : vector<1x224xf32>
    %33 = arith.mulf %27, %32 : vector<1x224xf32>
    %34 = arith.divf %25, %27 : vector<1x224xf32>
    %35 = arith.mulf %34, %29 : vector<1x224xf32>
    %36 = math.tanh %30 : vector<1x224xf32>
    %37 = arith.addf %35, %36 : vector<1x224xf32>
    %38 = arith.subf %37, %32 : vector<1x224xf32>
    %39 = arith.addf %38, %33 : vector<1x224xf32>
    %40 = math.absf %39 : vector<1x224xf32>
    %c4 = arith.constant 4 : index
    %41 = memref.load %arg1[%c4] : memref<31xf32, #tpu.memory_space<smem>>
    %c0_14 = arith.constant 0 : index
    %c0_15 = arith.constant 0 : index
    %c0_16 = arith.constant 0 : index
    %42 = vector.load %arg2[%c0_14, %c0_15, %c0_16] : memref<1x4x224xf32, #tpu.memory_space<vmem>>, vector<1x1x224xf32>
    %43 = vector.shape_cast %42 : vector<1x1x224xf32> to vector<1x224xf32>
    %44 = vector.broadcast %41 : f32 to vector<1x224xf32>
    %45 = arith.mulf %44, %43 : vector<1x224xf32>
    %c5 = arith.constant 5 : index
    %46 = memref.load %arg1[%c5] : memref<31xf32, #tpu.memory_space<smem>>
    %c0_17 = arith.constant 0 : index
    %c1_18 = arith.constant 1 : index
    %c0_19 = arith.constant 0 : index
    %47 = vector.load %arg2[%c0_17, %c1_18, %c0_19] : memref<1x4x224xf32, #tpu.memory_space<vmem>>, vector<1x1x224xf32>
    %48 = vector.shape_cast %47 : vector<1x1x224xf32> to vector<1x224xf32>
    %49 = vector.broadcast %46 : f32 to vector<1x224xf32>
    %50 = arith.mulf %49, %48 : vector<1x224xf32>
    %51 = arith.addf %45, %50 : vector<1x224xf32>
    %c6 = arith.constant 6 : index
    %52 = memref.load %arg1[%c6] : memref<31xf32, #tpu.memory_space<smem>>
    %c0_20 = arith.constant 0 : index
    %c2_21 = arith.constant 2 : index
    %c0_22 = arith.constant 0 : index
    %53 = vector.load %arg2[%c0_20, %c2_21, %c0_22] : memref<1x4x224xf32, #tpu.memory_space<vmem>>, vector<1x1x224xf32>
    %54 = vector.shape_cast %53 : vector<1x1x224xf32> to vector<1x224xf32>
    %55 = vector.broadcast %52 : f32 to vector<1x224xf32>
    %56 = arith.mulf %55, %54 : vector<1x224xf32>
    %57 = arith.addf %51, %56 : vector<1x224xf32>
    %c7 = arith.constant 7 : index
    %58 = memref.load %arg1[%c7] : memref<31xf32, #tpu.memory_space<smem>>
    %c0_23 = arith.constant 0 : index
    %c3_24 = arith.constant 3 : index
    %c0_25 = arith.constant 0 : index
    %59 = vector.load %arg2[%c0_23, %c3_24, %c0_25] : memref<1x4x224xf32, #tpu.memory_space<vmem>>, vector<1x1x224xf32>
    %60 = vector.shape_cast %59 : vector<1x1x224xf32> to vector<1x224xf32>
    %61 = vector.broadcast %58 : f32 to vector<1x224xf32>
    %62 = arith.mulf %61, %60 : vector<1x224xf32>
    %63 = arith.addf %57, %62 : vector<1x224xf32>
    %c21 = arith.constant 21 : index
    %64 = memref.load %arg1[%c21] : memref<31xf32, #tpu.memory_space<smem>>
    %65 = vector.broadcast %64 : f32 to vector<1x224xf32>
    %66 = arith.addf %63, %65 : vector<1x224xf32>
    %cst_26 = arith.constant 5.000000e-01 : f32
    %67 = vector.broadcast %cst_26 : f32 to vector<1x224xf32>
    %68 = arith.mulf %66, %67 : vector<1x224xf32>
    %cst_27 = arith.constant 0.707106769 : f32
    %69 = vector.broadcast %cst_27 : f32 to vector<1x224xf32>
    %70 = arith.mulf %66, %69 : vector<1x224xf32>
    %71 = math.erf %70 : vector<1x224xf32>
    %cst_28 = arith.constant 1.000000e+00 : f32
    %72 = vector.broadcast %cst_28 : f32 to vector<1x224xf32>
    %73 = arith.addf %71, %72 : vector<1x224xf32>
    %74 = arith.mulf %68, %73 : vector<1x224xf32>
    %75 = arith.divf %66, %68 : vector<1x224xf32>
    %76 = arith.mulf %75, %70 : vector<1x224xf32>
    %77 = math.tanh %71 : vector<1x224xf32>
    %78 = arith.addf %76, %77 : vector<1x224xf32>
    %79 = arith.subf %78, %73 : vector<1x224xf32>
    %80 = arith.addf %79, %74 : vector<1x224xf32>
    %81 = math.absf %80 : vector<1x224xf32>
    %c8 = arith.constant 8 : index
    %82 = memref.load %arg1[%c8] : memref<31xf32, #tpu.memory_space<smem>>
    %c0_29 = arith.constant 0 : index
    %c0_30 = arith.constant 0 : index
    %c0_31 = arith.constant 0 : index
    %83 = vector.load %arg2[%c0_29, %c0_30, %c0_31] : memref<1x4x224xf32, #tpu.memory_space<vmem>>, vector<1x1x224xf32>
    %84 = vector.shape_cast %83 : vector<1x1x224xf32> to vector<1x224xf32>
    %85 = vector.broadcast %82 : f32 to vector<1x224xf32>
    %86 = arith.mulf %85, %84 : vector<1x224xf32>
    %c9 = arith.constant 9 : index
    %87 = memref.load %arg1[%c9] : memref<31xf32, #tpu.memory_space<smem>>
    %c0_32 = arith.constant 0 : index
    %c1_33 = arith.constant 1 : index
    %c0_34 = arith.constant 0 : index
    %88 = vector.load %arg2[%c0_32, %c1_33, %c0_34] : memref<1x4x224xf32, #tpu.memory_space<vmem>>, vector<1x1x224xf32>
    %89 = vector.shape_cast %88 : vector<1x1x224xf32> to vector<1x224xf32>
    %90 = vector.broadcast %87 : f32 to vector<1x224xf32>
    %91 = arith.mulf %90, %89 : vector<1x224xf32>
    %92 = arith.addf %86, %91 : vector<1x224xf32>
    %c10 = arith.constant 10 : index
    %93 = memref.load %arg1[%c10] : memref<31xf32, #tpu.memory_space<smem>>
    %c0_35 = arith.constant 0 : index
    %c2_36 = arith.constant 2 : index
    %c0_37 = arith.constant 0 : index
    %94 = vector.load %arg2[%c0_35, %c2_36, %c0_37] : memref<1x4x224xf32, #tpu.memory_space<vmem>>, vector<1x1x224xf32>
    %95 = vector.shape_cast %94 : vector<1x1x224xf32> to vector<1x224xf32>
    %96 = vector.broadcast %93 : f32 to vector<1x224xf32>
    %97 = arith.mulf %96, %95 : vector<1x224xf32>
    %98 = arith.addf %92, %97 : vector<1x224xf32>
    %c11 = arith.constant 11 : index
    %99 = memref.load %arg1[%c11] : memref<31xf32, #tpu.memory_space<smem>>
    %c0_38 = arith.constant 0 : index
    %c3_39 = arith.constant 3 : index
    %c0_40 = arith.constant 0 : index
    %100 = vector.load %arg2[%c0_38, %c3_39, %c0_40] : memref<1x4x224xf32, #tpu.memory_space<vmem>>, vector<1x1x224xf32>
    %101 = vector.shape_cast %100 : vector<1x1x224xf32> to vector<1x224xf32>
    %102 = vector.broadcast %99 : f32 to vector<1x224xf32>
    %103 = arith.mulf %102, %101 : vector<1x224xf32>
    %104 = arith.addf %98, %103 : vector<1x224xf32>
    %c22 = arith.constant 22 : index
    %105 = memref.load %arg1[%c22] : memref<31xf32, #tpu.memory_space<smem>>
    %106 = vector.broadcast %105 : f32 to vector<1x224xf32>
    %107 = arith.addf %104, %106 : vector<1x224xf32>
    %cst_41 = arith.constant 5.000000e-01 : f32
    %108 = vector.broadcast %cst_41 : f32 to vector<1x224xf32>
    %109 = arith.mulf %107, %108 : vector<1x224xf32>
    %cst_42 = arith.constant 0.707106769 : f32
    %110 = vector.broadcast %cst_42 : f32 to vector<1x224xf32>
    %111 = arith.mulf %107, %110 : vector<1x224xf32>
    %112 = math.erf %111 : vector<1x224xf32>
    %cst_43 = arith.constant 1.000000e+00 : f32
    %113 = vector.broadcast %cst_43 : f32 to vector<1x224xf32>
    %114 = arith.addf %112, %113 : vector<1x224xf32>
    %115 = arith.mulf %109, %114 : vector<1x224xf32>
    %116 = arith.divf %107, %109 : vector<1x224xf32>
    %117 = arith.mulf %116, %111 : vector<1x224xf32>
    %118 = math.tanh %112 : vector<1x224xf32>
    %119 = arith.addf %117, %118 : vector<1x224xf32>
    %120 = arith.subf %119, %114 : vector<1x224xf32>
    %121 = arith.addf %120, %115 : vector<1x224xf32>
    %122 = math.absf %121 : vector<1x224xf32>
    %c12 = arith.constant 12 : index
    %123 = memref.load %arg1[%c12] : memref<31xf32, #tpu.memory_space<smem>>
    %c0_44 = arith.constant 0 : index
    %c0_45 = arith.constant 0 : index
    %c0_46 = arith.constant 0 : index
    %124 = vector.load %arg2[%c0_44, %c0_45, %c0_46] : memref<1x4x224xf32, #tpu.memory_space<vmem>>, vector<1x1x224xf32>
    %125 = vector.shape_cast %124 : vector<1x1x224xf32> to vector<1x224xf32>
    %126 = vector.broadcast %123 : f32 to vector<1x224xf32>
    %127 = arith.mulf %126, %125 : vector<1x224xf32>
    %c13 = arith.constant 13 : index
    %128 = memref.load %arg1[%c13] : memref<31xf32, #tpu.memory_space<smem>>
    %c0_47 = arith.constant 0 : index
    %c1_48 = arith.constant 1 : index
    %c0_49 = arith.constant 0 : index
    %129 = vector.load %arg2[%c0_47, %c1_48, %c0_49] : memref<1x4x224xf32, #tpu.memory_space<vmem>>, vector<1x1x224xf32>
    %130 = vector.shape_cast %129 : vector<1x1x224xf32> to vector<1x224xf32>
    %131 = vector.broadcast %128 : f32 to vector<1x224xf32>
    %132 = arith.mulf %131, %130 : vector<1x224xf32>
    %133 = arith.addf %127, %132 : vector<1x224xf32>
    %c14 = arith.constant 14 : index
    %134 = memref.load %arg1[%c14] : memref<31xf32, #tpu.memory_space<smem>>
    %c0_50 = arith.constant 0 : index
    %c2_51 = arith.constant 2 : index
    %c0_52 = arith.constant 0 : index
    %135 = vector.load %arg2[%c0_50, %c2_51, %c0_52] : memref<1x4x224xf32, #tpu.memory_space<vmem>>, vector<1x1x224xf32>
    %136 = vector.shape_cast %135 : vector<1x1x224xf32> to vector<1x224xf32>
    %137 = vector.broadcast %134 : f32 to vector<1x224xf32>
    %138 = arith.mulf %137, %136 : vector<1x224xf32>
    %139 = arith.addf %133, %138 : vector<1x224xf32>
    %c15 = arith.constant 15 : index
    %140 = memref.load %arg1[%c15] : memref<31xf32, #tpu.memory_space<smem>>
    %c0_53 = arith.constant 0 : index
    %c3_54 = arith.constant 3 : index
    %c0_55 = arith.constant 0 : index
    %141 = vector.load %arg2[%c0_53, %c3_54, %c0_55] : memref<1x4x224xf32, #tpu.memory_space<vmem>>, vector<1x1x224xf32>
    %142 = vector.shape_cast %141 : vector<1x1x224xf32> to vector<1x224xf32>
    %143 = vector.broadcast %140 : f32 to vector<1x224xf32>
    %144 = arith.mulf %143, %142 : vector<1x224xf32>
    %145 = arith.addf %139, %144 : vector<1x224xf32>
    %c23 = arith.constant 23 : index
    %146 = memref.load %arg1[%c23] : memref<31xf32, #tpu.memory_space<smem>>
    %147 = vector.broadcast %146 : f32 to vector<1x224xf32>
    %148 = arith.addf %145, %147 : vector<1x224xf32>
    %cst_56 = arith.constant 5.000000e-01 : f32
    %149 = vector.broadcast %cst_56 : f32 to vector<1x224xf32>
    %150 = arith.mulf %148, %149 : vector<1x224xf32>
    %cst_57 = arith.constant 0.707106769 : f32
    %151 = vector.broadcast %cst_57 : f32 to vector<1x224xf32>
    %152 = arith.mulf %148, %151 : vector<1x224xf32>
    %153 = math.erf %152 : vector<1x224xf32>
    %cst_58 = arith.constant 1.000000e+00 : f32
    %154 = vector.broadcast %cst_58 : f32 to vector<1x224xf32>
    %155 = arith.addf %153, %154 : vector<1x224xf32>
    %156 = arith.mulf %150, %155 : vector<1x224xf32>
    %157 = arith.divf %148, %150 : vector<1x224xf32>
    %158 = arith.mulf %157, %152 : vector<1x224xf32>
    %159 = math.tanh %153 : vector<1x224xf32>
    %160 = arith.addf %158, %159 : vector<1x224xf32>
    %161 = arith.subf %160, %155 : vector<1x224xf32>
    %162 = arith.addf %161, %156 : vector<1x224xf32>
    %163 = math.absf %162 : vector<1x224xf32>
    %c16 = arith.constant 16 : index
    %164 = memref.load %arg1[%c16] : memref<31xf32, #tpu.memory_space<smem>>
    %c0_59 = arith.constant 0 : index
    %c0_60 = arith.constant 0 : index
    %c0_61 = arith.constant 0 : index
    %165 = vector.load %arg2[%c0_59, %c0_60, %c0_61] : memref<1x4x224xf32, #tpu.memory_space<vmem>>, vector<1x1x224xf32>
    %166 = vector.shape_cast %165 : vector<1x1x224xf32> to vector<1x224xf32>
    %167 = vector.broadcast %164 : f32 to vector<1x224xf32>
    %168 = arith.mulf %167, %166 : vector<1x224xf32>
    %c17 = arith.constant 17 : index
    %169 = memref.load %arg1[%c17] : memref<31xf32, #tpu.memory_space<smem>>
    %c0_62 = arith.constant 0 : index
    %c1_63 = arith.constant 1 : index
    %c0_64 = arith.constant 0 : index
    %170 = vector.load %arg2[%c0_62, %c1_63, %c0_64] : memref<1x4x224xf32, #tpu.memory_space<vmem>>, vector<1x1x224xf32>
    %171 = vector.shape_cast %170 : vector<1x1x224xf32> to vector<1x224xf32>
    %172 = vector.broadcast %169 : f32 to vector<1x224xf32>
    %173 = arith.mulf %172, %171 : vector<1x224xf32>
    %174 = arith.addf %168, %173 : vector<1x224xf32>
    %c18 = arith.constant 18 : index
    %175 = memref.load %arg1[%c18] : memref<31xf32, #tpu.memory_space<smem>>
    %c0_65 = arith.constant 0 : index
    %c2_66 = arith.constant 2 : index
    %c0_67 = arith.constant 0 : index
    %176 = vector.load %arg2[%c0_65, %c2_66, %c0_67] : memref<1x4x224xf32, #tpu.memory_space<vmem>>, vector<1x1x224xf32>
    %177 = vector.shape_cast %176 : vector<1x1x224xf32> to vector<1x224xf32>
    %178 = vector.broadcast %175 : f32 to vector<1x224xf32>
    %179 = arith.mulf %178, %177 : vector<1x224xf32>
    %180 = arith.addf %174, %179 : vector<1x224xf32>
    %c19 = arith.constant 19 : index
    %181 = memref.load %arg1[%c19] : memref<31xf32, #tpu.memory_space<smem>>
    %c0_68 = arith.constant 0 : index
    %c3_69 = arith.constant 3 : index
    %c0_70 = arith.constant 0 : index
    %182 = vector.load %arg2[%c0_68, %c3_69, %c0_70] : memref<1x4x224xf32, #tpu.memory_space<vmem>>, vector<1x1x224xf32>
    %183 = vector.shape_cast %182 : vector<1x1x224xf32> to vector<1x224xf32>
    %184 = vector.broadcast %181 : f32 to vector<1x224xf32>
    %185 = arith.mulf %184, %183 : vector<1x224xf32>
    %186 = arith.addf %180, %185 : vector<1x224xf32>
    %c24 = arith.constant 24 : index
    %187 = memref.load %arg1[%c24] : memref<31xf32, #tpu.memory_space<smem>>
    %188 = vector.broadcast %187 : f32 to vector<1x224xf32>
    %189 = arith.addf %186, %188 : vector<1x224xf32>
    %cst_71 = arith.constant 5.000000e-01 : f32
    %190 = vector.broadcast %cst_71 : f32 to vector<1x224xf32>
    %191 = arith.mulf %189, %190 : vector<1x224xf32>
    %cst_72 = arith.constant 0.707106769 : f32
    %192 = vector.broadcast %cst_72 : f32 to vector<1x224xf32>
    %193 = arith.mulf %189, %192 : vector<1x224xf32>
    %194 = math.erf %193 : vector<1x224xf32>
    %cst_73 = arith.constant 1.000000e+00 : f32
    %195 = vector.broadcast %cst_73 : f32 to vector<1x224xf32>
    %196 = arith.addf %194, %195 : vector<1x224xf32>
    %197 = arith.mulf %191, %196 : vector<1x224xf32>
    %198 = arith.divf %189, %191 : vector<1x224xf32>
    %199 = arith.mulf %198, %193 : vector<1x224xf32>
    %200 = math.tanh %194 : vector<1x224xf32>
    %201 = arith.addf %199, %200 : vector<1x224xf32>
    %202 = arith.subf %201, %196 : vector<1x224xf32>
    %203 = arith.addf %202, %197 : vector<1x224xf32>
    %204 = math.absf %203 : vector<1x224xf32>
    %c25 = arith.constant 25 : index
    %205 = memref.load %arg1[%c25] : memref<31xf32, #tpu.memory_space<smem>>
    %206 = vector.broadcast %205 : f32 to vector<1x224xf32>
    %207 = arith.mulf %40, %206 : vector<1x224xf32>
    %c30 = arith.constant 30 : index
    %208 = memref.load %arg1[%c30] : memref<31xf32, #tpu.memory_space<smem>>
    %209 = vector.broadcast %208 : f32 to vector<1x224xf32>
    %210 = arith.addf %207, %209 : vector<1x224xf32>
    %c26 = arith.constant 26 : index
    %211 = memref.load %arg1[%c26] : memref<31xf32, #tpu.memory_space<smem>>
    %212 = vector.broadcast %211 : f32 to vector<1x224xf32>
    %213 = arith.mulf %212, %81 : vector<1x224xf32>
    %214 = arith.addf %210, %213 : vector<1x224xf32>
    %c27 = arith.constant 27 : index
    %215 = memref.load %arg1[%c27] : memref<31xf32, #tpu.memory_space<smem>>
    %216 = vector.broadcast %215 : f32 to vector<1x224xf32>
    %217 = arith.mulf %216, %122 : vector<1x224xf32>
    %218 = arith.addf %214, %217 : vector<1x224xf32>
    %c28 = arith.constant 28 : index
    %219 = memref.load %arg1[%c28] : memref<31xf32, #tpu.memory_space<smem>>
    %220 = vector.broadcast %219 : f32 to vector<1x224xf32>
    %221 = arith.mulf %220, %163 : vector<1x224xf32>
    %222 = arith.addf %218, %221 : vector<1x224xf32>
    %c29 = arith.constant 29 : index
    %223 = memref.load %arg1[%c29] : memref<31xf32, #tpu.memory_space<smem>>
    %224 = vector.broadcast %223 : f32 to vector<1x224xf32>
    %225 = arith.mulf %224, %204 : vector<1x224xf32>
    %226 = arith.addf %222, %225 : vector<1x224xf32>
    %c0_74 = arith.constant 0 : index
    %c0_75 = arith.constant 0 : index
    %c0_76 = arith.constant 0 : index
    %227 = vector.load %arg3[%c0_74, %c0_75, %c0_76] : memref<1x1x224xf32, #tpu.memory_space<vmem>>, vector<1x1x224xf32>
    %228 = vector.shape_cast %227 : vector<1x1x224xf32> to vector<1x224xf32>
    %229 = vector.shape_cast %226 : vector<1x224xf32> to vector<1x1x224xf32>
    tpu.vector_store %arg3[%c0_74, %c0_75, %c0_76], %229 {strides = array<i32>} : memref<1x1x224xf32, #tpu.memory_space<vmem>>, vector<1x1x224xf32>,
    return
  }
  func.func @transform_0(%arg0: i32) -> i32 {
    %c0_i32 = arith.constant 0 : i32
    %c0_i32_0 = arith.constant 0 : i32
    return %c0_i32 : i32
  }
  func.func @transform_1(%arg0: i32) -> (i32, i32, i32) {
    %c0_i32 = arith.constant 0 : i32
    %c0_i32_0 = arith.constant 0 : i32
    %c0_i32_1 = arith.constant 0 : i32
    return %arg0, %c0_i32, %c0_i32_0 : i32, i32, i32
  }
  func.func @transform_2(%arg0: i32) -> (i32, i32, i32) {
    %c0_i32 = arith.constant 0 : i32
    %c0_i32_0 = arith.constant 0 : i32
    %c0_i32_1 = arith.constant 0 : i32
    return %arg0, %c0_i32, %c0_i32_0 : i32, i32, i32
  }
}

</mosaic_0001>

<llo_original>
// kernel: model_forward.1
$region0: #{model_forward.1}
  #allocation0 [shape = 'u32[]', space=smem, size = 0x4, offset = 0x4, fixed_abs, tag = 'smem constant byte address 0x4 - core index']
  #allocation1 [shape = 'u32[144,128]{1,0:T(1,128)}', space=vmem, size = 0x12000, scoped, tag = 'internal scratch']
  %s0 = inlined_call_operand.vmem [shape: f32[31], index: 0, kind: input, shape index: {}]
  %s1 = inlined_call_operand.vmem [shape: f32[1,4,224], index: 1, kind: input, shape index: {}]
  %s2 = inlined_call_operand.vmem [shape: f32[1,1,224], index: 2, kind: output, shape index: {}]
  %s3 = sld [smem:[#allocation0]]
  $region22: #{model_forward.1} parent=0
    _
  %s5 = ssub.s32 1, %s3
  %s6 = scalar_select 0, %s5, %s3
  $region1: #{model_forward.1} parent=0
    #allocation2 [shape = 'u8[512]{0}', space=smem, size = 0x200, scoped, tag = 'input window, operand 0, single buffered']
    #allocation3 [shape = 's32[1]{0}', space=sflag, size = 0x4, scoped, tag = 'scoped memory for model_forward.1']
    %7 = vsyncpa [#allocation3], 0
    // Predicated region
    $region2: #{model_forward.1} parent=1 // pred_check
      _
    $region3: #{model_forward.1} parent=1 // pred_check_branch
      %9 = sbr.rel (0) target = $region5
    $region4: #{model_forward.1} parent=1 // pred_region
      %s11 = ssub.s32 16, 16
      %12 = vsyncadd [#allocation3], %s11
      %s14 = sshll.u32 %s0, 4
      %s15 = int_to_ptr.vmem [resolvable:$true] %s14
      %17 = dma.vmem_to_smem %s15, 16, [#allocation2], [#allocation3]
    $region5: #{model_forward.1} parent=1 // pred_fallthru
      _
    // Predicated region
    $region6: #{model_forward.1} parent=1 // pred_check
      _
    $region7: #{model_forward.1} parent=1 // pred_check_branch
      %19 = sbr.rel (0) target = $region9
    $region8: #{model_forward.1} parent=1 // pred_region
      _
    $region9: #{model_forward.1} parent=1 // pred_fallthru
      _
    // Predicated region
    $region10: #{model_forward.1} parent=1 // pred_check
      _
    $region11: #{model_forward.1} parent=1 // pred_check_branch
      %21 = sbr.rel (0) target = $region13
    $region12: #{model_forward.1} parent=1 // pred_region
      %22 = dma.done [#allocation3], 16
    $region13: #{model_forward.1} parent=1 // pred_fallthru
      _
    %23 = sfence
    %s24 = sld [smem:[#allocation2]]
    %v25 = vld [vmem:[%s1] ss:$4 sm:$0x3]
    %v26 = vstv %s24
    %v27 = vmul.f32 %v26, %v25
    %s28 = sld [smem:[#allocation2 + $0x1]]
    %s29 = scalar_lea.vmem %s1, 1
    %v30 = vld [vmem:[%s29] ss:$4 sm:$0x3]
    %v31 = vstv %s28
    %v32 = vmul.f32 %v31, %v30
    %v33 = vadd.f32 %v27, %v32
    %s34 = sld [smem:[#allocation2 + $0x2]]
    %s35 = scalar_lea.vmem %s1, 2
    %v36 = vld [vmem:[%s35] ss:$4 sm:$0x3]
    %v37 = vstv %s34
    %v38 = vmul.f32 %v37, %v36
    %v39 = vadd.f32 %v33, %v38
    %s40 = sld [smem:[#allocation2 + $0x3]]
    %s41 = scalar_lea.vmem %s1, 3
    %v42 = vld [vmem:[%s41] ss:$4 sm:$0x3]
    %v43 = vstv %s40
    %v44 = vmul.f32 %v43, %v42
    %v45 = vadd.f32 %v39, %v44
    %s46 = sld [smem:[#allocation2 + $0x14]]
    %v47 = vstv %s46
    %v48 = vadd.f32 %v45, %v47
    %v49 = vmul.f32 %v48, 0.5
    %v50 = vmul.f32 %v48, 0.70710677
    %v51 = verf.f32.pop %v50
    %v52 = vadd.f32 %v51, 1.0
    %v53 = vmul.f32 %v49, %v52
    %v54 = vrcp.pop %v49
    %v55 = vmul.f32 %v48, %v54
    %v56 = vmul.f32 %v55, %v50
    %v57 = vtanh.pop %v51
    %v58 = vadd.f32 %v56, %v57
    %v59 = vsub.f32 %v58, %v52
    %v60 = vadd.f32 %v59, %v53
    %v61 = vand.u32 2147483647, %v60
    %s62 = sld [smem:[#allocation2 + $0x4]]
    %v63 = vstv %s62
    %v64 = vmul.f32 %v63, %v25
    %s65 = sld [smem:[#allocation2 + $0x5]]
    %v66 = vstv %s65
    %v67 = vmul.f32 %v66, %v30
    %v68 = vadd.f32 %v64, %v67
    %s69 = sld [smem:[#allocation2 + $0x6]]
    %v70 = vstv %s69
    %v71 = vmul.f32 %v70, %v36
    %v72 = vadd.f32 %v68, %v71
    %s73 = sld [smem:[#allocation2 + $0x7]]
    %v74 = vstv %s73
    %v75 = vmul.f32 %v74, %v42
    %v76 = vadd.f32 %v72, %v75
    %s77 = sld [smem:[#allocation2 + $0x15]]
    %v78 = vstv %s77
    %v79 = vadd.f32 %v76, %v78
    %v80 = vmul.f32 %v79, 0.5
    %v81 = vmul.f32 %v79, 0.70710677
    %v82 = verf.f32.pop %v81
    %v83 = vadd.f32 %v82, 1.0
    %v84 = vmul.f32 %v80, %v83
    %v85 = vrcp.pop %v80
    %v86 = vmul.f32 %v79, %v85
    %v87 = vmul.f32 %v86, %v81
    %v88 = vtanh.pop %v82
    %v89 = vadd.f32 %v87, %v88
    %v90 = vsub.f32 %v89, %v83
    %v91 = vadd.f32 %v90, %v84
    %v92 = vand.u32 2147483647, %v91
    %s93 = sld [smem:[#allocation2 + $0x8]]
    %v94 = vstv %s93
    %v95 = vmul.f32 %v94, %v25
    %s96 = sld [smem:[#allocation2 + $0x9]]
    %v97 = vstv %s96
    %v98 = vmul.f32 %v97, %v30
    %v99 = vadd.f32 %v95, %v98
    %s100 = sld [smem:[#allocation2 + $0xa]]
    %v101 = vstv %s100
    %v102 = vmul.f32 %v101, %v36
    %v103 = vadd.f32 %v99, %v102
    %s104 = sld [smem:[#allocation2 + $0xb]]
    %v105 = vstv %s104
    %v106 = vmul.f32 %v105, %v42
    %v107 = vadd.f32 %v103, %v106
    %s108 = sld [smem:[#allocation2 + $0x16]]
    %v109 = vstv %s108
    %v110 = vadd.f32 %v107, %v109
    %v111 = vmul.f32 %v110, 0.5
    %v112 = vmul.f32 %v110, 0.70710677
    %v113 = verf.f32.pop %v112
    %v114 = vadd.f32 %v113, 1.0
    %v115 = vmul.f32 %v111, %v114
    %v116 = vrcp.pop %v111
    %v117 = vmul.f32 %v110, %v116
    %v118 = vmul.f32 %v117, %v112
    %v119 = vtanh.pop %v113
    %v120 = vadd.f32 %v118, %v119
    %v121 = vsub.f32 %v120, %v114
    %v122 = vadd.f32 %v121, %v115
    %v123 = vand.u32 2147483647, %v122
    %s124 = sld [smem:[#allocation2 + $0xc]]
    %v125 = vstv %s124
    %v126 = vmul.f32 %v125, %v25
    %s127 = sld [smem:[#allocation2 + $0xd]]
    %v128 = vstv %s127
    %v129 = vmul.f32 %v128, %v30
    %v130 = vadd.f32 %v126, %v129
    %s131 = sld [smem:[#allocation2 + $0xe]]
    %v132 = vstv %s131
    %v133 = vmul.f32 %v132, %v36
    %v134 = vadd.f32 %v130, %v133
    %s135 = sld [smem:[#allocation2 + $0xf]]
    %v136 = vstv %s135
    %v137 = vmul.f32 %v136, %v42
    %v138 = vadd.f32 %v134, %v137
    %s139 = sld [smem:[#allocation2 + $0x17]]
    %v140 = vstv %s139
    %v141 = vadd.f32 %v138, %v140
    %v142 = vmul.f32 %v141, 0.5
    %v143 = vmul.f32 %v141, 0.70710677
    %v144 = verf.f32.pop %v143
    %v145 = vadd.f32 %v144, 1.0
    %v146 = vmul.f32 %v142, %v145
    %v147 = vrcp.pop %v142
    %v148 = vmul.f32 %v141, %v147
    %v149 = vmul.f32 %v148, %v143
    %v150 = vtanh.pop %v144
    %v151 = vadd.f32 %v149, %v150
    %v152 = vsub.f32 %v151, %v145
    %v153 = vadd.f32 %v152, %v146
    %v154 = vand.u32 2147483647, %v153
    %s155 = sld [smem:[#allocation2 + $0x10]]
    %v156 = vstv %s155
    %v157 = vmul.f32 %v156, %v25
    %s158 = sld [smem:[#allocation2 + $0x11]]
    %v159 = vstv %s158
    %v160 = vmul.f32 %v159, %v30
    %v161 = vadd.f32 %v157, %v160
    %s162 = sld [smem:[#allocation2 + $0x12]]
    %v163 = vstv %s162
    %v164 = vmul.f32 %v163, %v36
    %v165 = vadd.f32 %v161, %v164
    %s166 = sld [smem:[#allocation2 + $0x13]]
    %v167 = vstv %s166
    %v168 = vmul.f32 %v167, %v42
    %v169 = vadd.f32 %v165, %v168
    %s170 = sld [smem:[#allocation2 + $0x18]]
    %v171 = vstv %s170
    %v172 = vadd.f32 %v169, %v171
    %v173 = vmul.f32 %v172, 0.5
    %v174 = vmul.f32 %v172, 0.70710677
    %v175 = verf.f32.pop %v174
    %v176 = vadd.f32 %v175, 1.0
    %v177 = vmul.f32 %v173, %v176
    %v178 = vrcp.pop %v173
    %v179 = vmul.f32 %v172, %v178
    %v180 = vmul.f32 %v179, %v174
    %v181 = vtanh.pop %v175
    %v182 = vadd.f32 %v180, %v181
    %v183 = vsub.f32 %v182, %v176
    %v184 = vadd.f32 %v183, %v177
    %v185 = vand.u32 2147483647, %v184
    %s186 = sld [smem:[#allocation2 + $0x19]]
    %v187 = vstv %s186
    %v188 = vmul.f32 %v61, %v187
    %s189 = sld [smem:[#allocation2 + $0x1e]]
    %v190 = vstv %s189
    %v191 = vadd.f32 %v188, %v190
    %s192 = sld [smem:[#allocation2 + $0x1a]]
    %v193 = vstv %s192
    %v194 = vmul.f32 %v193, %v92
    %v195 = vadd.f32 %v191, %v194
    %s196 = sld [smem:[#allocation2 + $0x1b]]
    %v197 = vstv %s196
    %v198 = vmul.f32 %v197, %v123
    %v199 = vadd.f32 %v195, %v198
    %s200 = sld [smem:[#allocation2 + $0x1c]]
    %v201 = vstv %s200
    %v202 = vmul.f32 %v201, %v154
    %v203 = vadd.f32 %v199, %v202
    %s204 = sld [smem:[#allocation2 + $0x1d]]
    %v205 = vstv %s204
    %v206 = vmul.f32 %v205, %v185
    %v207 = vadd.f32 %v203, %v206
    %v208 = vlaneseq
    %vm209 = vcmp.ge.s32.totalorder %v208, 0
    %vm210 = vcmp.lt.s32.totalorder %v208, 224
    %vm211 = vmand %vm209, %vm210
    %212 = vst.msk [vmem:[%s2] sm:$0x3] %vm211, %v207
    // Predicated region
    $region14: #{model_forward.1} parent=1 // pred_check
      _
    $region15: #{model_forward.1} parent=1 // pred_check_branch
      %214 = sbr.rel (0) target = $region17
    $region16: #{model_forward.1} parent=1 // pred_region
      _
    $region17: #{model_forward.1} parent=1 // pred_fallthru
      _
    // Predicated region
    $region18: #{model_forward.1} parent=1 // pred_check
      _
    $region19: #{model_forward.1} parent=1 // pred_check_branch
      %216 = sbr.rel (0) target = $region21
    $region20: #{model_forward.1} parent=1 // pred_region
      _
    $region21: #{model_forward.1} parent=1 // pred_fallthru
      _
    %217 = vsyncpa [#allocation3], 1

</llo_original>
